<compile_context>
chip_gen: v7x
topology: tpu7x:2x2x1
jax: 0.10.0
libtpu: 0.0.40
codegen_flags: <defaults>
</compile_context>

<pallas_src>
import numpy as np  # host-side float64 inverse for the reverse path

import jax
import jax.numpy as jnp
from jax.experimental import pallas as pl
from jax.experimental.pallas import tpu as pltpu


def _invconv_kernel(w_ref, xa_ref, xb_ref, oa_ref, ob_ref):
    """One (N, lane-tile) grid step.

    Shapes inside the kernel (batch dim squeezed out):
      w_ref : (2, 2, C/2, C/2)  resident weight quadrants (w_ref[a, b])
      x?_ref: (C/2, tm)         input lane tiles
      o?_ref: (C/2, tm)         output lane tiles
    """
    xa = xa_ref[...]
    xb = xb_ref[...]
    oa_ref[...] = (
        jnp.dot(w_ref[0, 0], xa, preferred_element_type=jnp.float32)
        + jnp.dot(w_ref[0, 1], xb, preferred_element_type=jnp.float32)
    ).astype(oa_ref.dtype)
    ob_ref[...] = (
        jnp.dot(w_ref[1, 0], xa, preferred_element_type=jnp.float32)
        + jnp.dot(w_ref[1, 1], xb, preferred_element_type=jnp.float32)
    ).astype(ob_ref.dtype)


def _vmem_config():
    """Return (tile_budget_bytes, vmem_limit_bytes) per TPU generation."""
    cap = None
    try:
        cap = getattr(pltpu.get_tpu_info(), "vmem_capacity_bytes", None)
    except Exception:
        cap = None
    if cap is None:
        cap = 64 * 1024 * 1024  # conservative (v7x-sized) fallback
    if cap >= 96 * 1024 * 1024:
        # v5e / v6e: 128 MiB physical VMEM -> large double-buffered slabs.
        return 48 * 1024 * 1024, 64 * 1024 * 1024
    # v7x: 64 MiB per TensorCore -> leave DMA / compiler headroom.
    return 20 * 1024 * 1024, 28 * 1024 * 1024


def _derive_tile(c_half, hw, n, *, vmem_budget_bytes, tm_cap=16384,
                 itemsize=4):
    """Pick lane-tile width tm (multiple of 128 dividing hw_pad) and hw_pad.

    Priority order:
      1. fit the VMEM budget (double-buffered in/out tiles + intermediates),
      2. give the grid enough steps to pipeline (>=4 total; >=8 if that keeps
         tm >= 512 lanes) so prefetch/writeback overlap compute and both v7x
         TensorCores get work,
      3. otherwise keep tiles as large as possible (per-step cost ~0.35 us).
    """
    hw_pad = ((hw + 127) // 128) * 128          # pad only to the next 128 lanes
    max_tiles = hw_pad // 128

    # Per lane the pipeline holds ~ (2 in + 2 out) * 2 buffers * c_half
    # elements plus ~2 * c_half of in-flight intermediates.
    bytes_per_lane = (4 * 2 + 2) * max(c_half, 1) * itemsize
    tm_vmem = max(128, (vmem_budget_bytes // bytes_per_lane) // 128 * 128)
    tm_max = min(tm_vmem, tm_cap)

    def tm_for_total_steps(total_steps):
        tiles_per_n = min(max_tiles, max(1, -(-total_steps // max(n, 1))))
        return max(128, (hw_pad // tiles_per_n) // 128 * 128)

    tm = min(tm_max, tm_for_total_steps(4))     # hard pipelining floor
    tm8 = min(tm_max, tm_for_total_steps(8))    # deeper pipeline if cheap
    if tm8 >= 512:
        tm = tm8
    while hw_pad % tm:                          # keep every tile full
        tm -= 128
    return tm, hw_pad


def _invconv_matmul_pair(w_q, x_a, x_b, *, tm, vmem_limit_bytes):
    """y_a, y_b = split(W @ concat(x_a, x_b)) without ever materializing the
    concatenated tensor.  x_a/x_b: (N, C/2, HW_pad); w_q: (2, 2, C/2, C/2)."""
    n, c_half, hw = x_a.shape
    assert hw % tm == 0

    grid = (n, hw // tm)

    # Whole weight is one tiny block with a constant index_map -> fetched once
    # and resident in VMEM for the entire grid.
    w_spec = pl.BlockSpec((2, 2, c_half, c_half), lambda ni, mi: (0, 0, 0, 0))
    # Activations / outputs: batch dim squeezed, lane-dense tm-wide tiles.
    x_spec = pl.BlockSpec((None, c_half, tm), lambda ni, mi: (ni, 0, mi))

    out_shape = jax.ShapeDtypeStruct((n, c_half, hw), x_a.dtype)

    itemsize = np.dtype(x_a.dtype).itemsize
    cost = pl.CostEstimate(
        flops=int(2 * (2 * c_half) * (2 * c_half) * n * hw),
        transcendentals=0,
        bytes_accessed=int(4 * n * c_half * hw * itemsize
                           + w_q.size * np.dtype(w_q.dtype).itemsize),
    )

    return pl.pallas_call(
        _invconv_kernel,
        out_shape=(out_shape, out_shape),
        grid_spec=pltpu.PrefetchScalarGridSpec(
            num_scalar_prefetch=0,
            grid=grid,
            in_specs=[w_spec, x_spec, x_spec],
            out_specs=(x_spec, x_spec),
        ),
        compiler_params=pltpu.CompilerParams(
            dimension_semantics=("parallel", "parallel"),
            vmem_limit_bytes=vmem_limit_bytes,
        ),
        cost_estimate=cost,
    )(w_q, x_a, x_b)


def inv_conv_forward(xs, cond, sldj, weight, reverse=False,
                     activation_dtype=None):
    """Matches InvConv.forward semantics.

    Args:
      xs: tuple/list of NCHW arrays (the coupling halves) or one NCHW array.
      cond: unused (kept for signature parity).
      sldj: (N,) sum log-det-Jacobian.
      weight: (C, C) float32, C = total channels after concat.
      reverse: invert the transform.
      activation_dtype: optional dtype (e.g. jnp.bfloat16) to carry the
        activations in — halves HBM bytes on this purely mem-bound op.

    Returns:
      ((y_a, y_b), sldj) — the NCHW channel halves (== x.chunk(2, dim=1)).
    """
    del cond

    if (isinstance(xs, (tuple, list)) and len(xs) == 2
            and xs[0].shape[1] == xs[1].shape[1]):
        x_a, x_b = xs
    else:
        # Uncommon layouts: mimic the reference exactly (cat + chunk(2) into
        # equal halves).  This re-introduces one concat HBM pass; the
        # equal-halves fast path above avoids it.
        x = jnp.concatenate(xs, axis=1) if isinstance(xs, (tuple, list)) else xs
        assert x.shape[1] % 2 == 0, "InvConv requires an even channel count"
        half = x.shape[1] // 2
        x_a, x_b = x[:, :half], x[:, half:]

    n, c_half, h, w_dim = x_a.shape
    hw = h * w_dim
    assert weight.shape == (2 * c_half, 2 * c_half), (
        f"weight shape {weight.shape} does not match 2*c_half={2 * c_half}")

    ldj = jnp.linalg.slogdet(weight)[1] * (h * w_dim)
    if reverse:
        # Reference inverts in float64; TPUs have no native f64, so invert on
        # the host in numpy float64 when the weight is concrete.
        try:
            w_np = np.asarray(jax.device_get(weight), dtype=np.float64)
            w_use = jnp.asarray(np.linalg.inv(w_np), dtype=weight.dtype)
        except Exception:
            # TODO(synk): under jit the weight is a tracer -> f32 inverse only.
            w_use = jnp.linalg.inv(weight)
        sldj = sldj - ldj
    else:
        w_use = weight
        sldj = sldj + ldj

    budget, vmem_limit = _vmem_config()
    act_dtype = x_a.dtype if activation_dtype is None else activation_dtype
    tm, hw_pad = _derive_tile(c_half, hw, n, vmem_budget_bytes=budget,
                              itemsize=np.dtype(act_dtype).itemsize)

    # Pre-block the weight into its quadrants: w_q[a, b] = W block (a, b).
    w_q = w_use.reshape(2, c_half, 2, c_half).transpose(0, 2, 1, 3)

    # (N, C/2, H, W) -> (N, C/2, H*W): contiguous view, no data movement.
    xa2 = x_a.reshape(n, c_half, hw)
    xb2 = x_b.reshape(n, c_half, hw)
    if activation_dtype is not None:
        xa2 = xa2.astype(activation_dtype)
        xb2 = xb2.astype(activation_dtype)
    if hw_pad != hw:
        # At most 127 extra lanes (tm always divides hw_pad).
        # TODO(synk): replace with an in-kernel masked store on the ragged
        # last tile to drop the pad/slice HBM passes entirely.
        pad = ((0, 0), (0, 0), (0, hw_pad - hw))
        xa2 = jnp.pad(xa2, pad)
        xb2 = jnp.pad(xb2, pad)

    y_a, y_b = _invconv_matmul_pair(w_q, xa2, xb2, tm=tm,
                                    vmem_limit_bytes=vmem_limit)

    if hw_pad != hw:
        y_a = y_a[:, :, :hw]
        y_b = y_b[:, :, :hw]

    y_a = y_a.reshape(n, c_half, h, w_dim)
    y_b = y_b.reshape(n, c_half, h, w_dim)
    return (y_a, y_b), sldj


if __name__ == "__main__":
    key = jax.random.PRNGKey(0)
    k_w, k_xa, k_xb = jax.random.split(key, 3)

    N, C, H, W = 2, 8, 16, 16  # full channel count after concat

    # Deterministic "noisy identity" init (random_init=False path).
    weight = (jnp.eye(C, dtype=jnp.float32)
              + 0.001 * jax.random.normal(k_w, (C, C), dtype=jnp.float32))

    # x is a tuple of two NCHW halves, as in the flow++ coupling layout.
    x_a = jax.random.normal(k_xa, (N, C // 2, H, W), dtype=jnp.float32)
    x_b = jax.random.normal(k_xb, (N, C // 2, H, W), dtype=jnp.float32)
    sldj = jnp.zeros((N,), dtype=jnp.float32)

    (out_a, out_b), sldj_out = inv_conv_forward((x_a, x_b), None, sldj, weight,
                                                reverse=False)
    jax.block_until_ready((out_a, out_b, sldj_out))

    # Reference check against plain-JAX 1x1 conv (einsum) semantics.
    x_full = jnp.concatenate((x_a, x_b), axis=1)
    y_ref = jnp.einsum("oc,nchw->nohw", weight, x_full)
    ldj_ref = jnp.linalg.slogdet(weight)[1] * (H * W)
    sldj_ref = sldj + ldj_ref
    y_out = jnp.concatenate((out_a, out_b), axis=1)

    assert out_a.shape == (N, C // 2, H, W) and out_b.shape == (N, C // 2, H, W)
    assert jnp.allclose(y_out, y_ref, atol=1e-5, rtol=1e-5)
    assert jnp.allclose(sldj_out, sldj_ref, atol=1e-5, rtol=1e-5)

    # Reverse-path round trip (uses the host float64 inverse).
    (ra, rb), sldj_back = inv_conv_forward((out_a, out_b), None, sldj_out,
                                           weight, reverse=True)
    jax.block_until_ready((ra, rb, sldj_back))
    assert jnp.allclose(ra, x_a, atol=1e-4, rtol=1e-4)
    assert jnp.allclose(rb, x_b, atol=1e-4, rtol=1e-4)
    assert jnp.allclose(sldj_back, sldj, atol=1e-4, rtol=1e-4)

    print("KERNEL_OK")
</pallas_src>

<mosaic_0001>
module attributes {stable_mosaic.version = 11 : i64} {
  func.func @_invconv_kernel(%arg0: i32, %arg1: i32, %arg2: memref<2x2x4x4xf32, #tpu.memory_space<vmem>>, %arg3: memref<1x4x128xf32, #tpu.memory_space<vmem>>, %arg4: memref<1x4x128xf32, #tpu.memory_space<vmem>>, %arg5: memref<1x4x128xf32, #tpu.memory_space<vmem>>, %arg6: memref<1x4x128xf32, #tpu.memory_space<vmem>>) attributes {dimension_semantics = [#tpu.dimension_semantics<parallel>, #tpu.dimension_semantics<parallel>], iteration_bounds = array<i64: 2, 2>, scalar_prefetch = 0 : i64, scratch_operands = 0 : i64, tpu.core_type = #tpu.core_type<tc>, window_params = [{pipeline_mode = #tpu.pipeline_mode<synchronous>, transform_indices = @transform_0, window_bounds = array<i64: 2, 2, 4, 4>}, {transform_indices = @transform_1, window_bounds = array<i64: 1, 4, 128>}, {transform_indices = @transform_2, window_bounds = array<i64: 1, 4, 128>}, {transform_indices = @transform_3, window_bounds = array<i64: 1, 4, 128>}, {transform_indices = @transform_4, window_bounds = array<i64: 1, 4, 128>}]} {
    %c0 = arith.constant 0 : index
    %c0_0 = arith.constant 0 : index
    %c0_1 = arith.constant 0 : index
    %0 = vector.load %arg3[%c0, %c0_0, %c0_1] : memref<1x4x128xf32, #tpu.memory_space<vmem>>, vector<1x4x128xf32>
    %1 = vector.shape_cast %0 : vector<1x4x128xf32> to vector<4x128xf32>
    %c0_2 = arith.constant 0 : index
    %c0_3 = arith.constant 0 : index
    %c0_4 = arith.constant 0 : index
    %2 = vector.load %arg4[%c0_2, %c0_3, %c0_4] : memref<1x4x128xf32, #tpu.memory_space<vmem>>, vector<1x4x128xf32>
    %3 = vector.shape_cast %2 : vector<1x4x128xf32> to vector<4x128xf32>
    %c0_5 = arith.constant 0 : index
    %c0_6 = arith.constant 0 : index
    %c0_7 = arith.constant 0 : index
    %c0_8 = arith.constant 0 : index
    %4 = vector.load %arg2[%c0_5, %c0_6, %c0_7, %c0_8] : memref<2x2x4x4xf32, #tpu.memory_space<vmem>>, vector<1x1x4x4xf32>
    %5 = vector.shape_cast %4 : vector<1x1x4x4xf32> to vector<4x4xf32>
    %cst = arith.constant dense<0.000000e+00> : vector<4x128xf32>
    %6 = tpu.matmul %5, %1, %cst {dimension_numbers = #tpu.dot_dimension_numbers<[1], [0], [0], [1], [0, 0, 1, 1], [], []>} : vector<4x4xf32>, vector<4x128xf32>, vector<4x128xf32> -> vector<4x128xf32>
    %c0_9 = arith.constant 0 : index
    %c1 = arith.constant 1 : index
    %c0_10 = arith.constant 0 : index
    %c0_11 = arith.constant 0 : index
    %7 = vector.load %arg2[%c0_9, %c1, %c0_10, %c0_11] : memref<2x2x4x4xf32, #tpu.memory_space<vmem>>, vector<1x1x4x4xf32>
    %8 = vector.shape_cast %7 : vector<1x1x4x4xf32> to vector<4x4xf32>
    %cst_12 = arith.constant dense<0.000000e+00> : vector<4x128xf32>
    %9 = tpu.matmul %8, %3, %cst_12 {dimension_numbers = #tpu.dot_dimension_numbers<[1], [0], [0], [1], [0, 0, 1, 1], [], []>} : vector<4x4xf32>, vector<4x128xf32>, vector<4x128xf32> -> vector<4x128xf32>
    %10 = arith.addf %6, %9 : vector<4x128xf32>
    %c0_13 = arith.constant 0 : index
    %c0_14 = arith.constant 0 : index
    %c0_15 = arith.constant 0 : index
    %11 = vector.load %arg5[%c0_13, %c0_14, %c0_15] : memref<1x4x128xf32, #tpu.memory_space<vmem>>, vector<1x4x128xf32>
    %12 = vector.shape_cast %11 : vector<1x4x128xf32> to vector<4x128xf32>
    %13 = vector.shape_cast %10 : vector<4x128xf32> to vector<1x4x128xf32>
    tpu.vector_store %arg5[%c0_13, %c0_14, %c0_15], %13 {strides = array<i32>} : memref<1x4x128xf32, #tpu.memory_space<vmem>>, vector<1x4x128xf32>,
    %c1_16 = arith.constant 1 : index
    %c0_17 = arith.constant 0 : index
    %c0_18 = arith.constant 0 : index
    %c0_19 = arith.constant 0 : index
    %14 = vector.load %arg2[%c1_16, %c0_17, %c0_18, %c0_19] : memref<2x2x4x4xf32, #tpu.memory_space<vmem>>, vector<1x1x4x4xf32>
    %15 = vector.shape_cast %14 : vector<1x1x4x4xf32> to vector<4x4xf32>
    %cst_20 = arith.constant dense<0.000000e+00> : vector<4x128xf32>
    %16 = tpu.matmul %15, %1, %cst_20 {dimension_numbers = #tpu.dot_dimension_numbers<[1], [0], [0], [1], [0, 0, 1, 1], [], []>} : vector<4x4xf32>, vector<4x128xf32>, vector<4x128xf32> -> vector<4x128xf32>
    %c1_21 = arith.constant 1 : index
    %c1_22 = arith.constant 1 : index
    %c0_23 = arith.constant 0 : index
    %c0_24 = arith.constant 0 : index
    %17 = vector.load %arg2[%c1_21, %c1_22, %c0_23, %c0_24] : memref<2x2x4x4xf32, #tpu.memory_space<vmem>>, vector<1x1x4x4xf32>
    %18 = vector.shape_cast %17 : vector<1x1x4x4xf32> to vector<4x4xf32>
    %cst_25 = arith.constant dense<0.000000e+00> : vector<4x128xf32>
    %19 = tpu.matmul %18, %3, %cst_25 {dimension_numbers = #tpu.dot_dimension_numbers<[1], [0], [0], [1], [0, 0, 1, 1], [], []>} : vector<4x4xf32>, vector<4x128xf32>, vector<4x128xf32> -> vector<4x128xf32>
    %20 = arith.addf %16, %19 : vector<4x128xf32>
    %c0_26 = arith.constant 0 : index
    %c0_27 = arith.constant 0 : index
    %c0_28 = arith.constant 0 : index
    %21 = vector.load %arg6[%c0_26, %c0_27, %c0_28] : memref<1x4x128xf32, #tpu.memory_space<vmem>>, vector<1x4x128xf32>
    %22 = vector.shape_cast %21 : vector<1x4x128xf32> to vector<4x128xf32>
    %23 = vector.shape_cast %20 : vector<4x128xf32> to vector<1x4x128xf32>
    tpu.vector_store %arg6[%c0_26, %c0_27, %c0_28], %23 {strides = array<i32>} : memref<1x4x128xf32, #tpu.memory_space<vmem>>, vector<1x4x128xf32>,
    return
  }
  func.func @transform_0(%arg0: i32, %arg1: i32) -> (i32, i32, i32, i32) {
    %c0_i32 = arith.constant 0 : i32
    %c0_i32_0 = arith.constant 0 : i32
    %c0_i32_1 = arith.constant 0 : i32
    %c0_i32_2 = arith.constant 0 : i32
    %c0_i32_3 = arith.constant 0 : i32
    return %c0_i32, %c0_i32_0, %c0_i32_1, %c0_i32_2 : i32, i32, i32, i32
  }
  func.func @transform_1(%arg0: i32, %arg1: i32) -> (i32, i32, i32) {
    %c0_i32 = arith.constant 0 : i32
    %c0_i32_0 = arith.constant 0 : i32
    return %arg0, %c0_i32, %arg1 : i32, i32, i32
  }
  func.func @transform_2(%arg0: i32, %arg1: i32) -> (i32, i32, i32) {
    %c0_i32 = arith.constant 0 : i32
    %c0_i32_0 = arith.constant 0 : i32
    return %arg0, %c0_i32, %arg1 : i32, i32, i32
  }
  func.func @transform_3(%arg0: i32, %arg1: i32) -> (i32, i32, i32) {
    %c0_i32 = arith.constant 0 : i32
    %c0_i32_0 = arith.constant 0 : i32
    return %arg0, %c0_i32, %arg1 : i32, i32, i32
  }
  func.func @transform_4(%arg0: i32, %arg1: i32) -> (i32, i32, i32) {
    %c0_i32 = arith.constant 0 : i32
    %c0_i32_0 = arith.constant 0 : i32
    return %arg0, %c0_i32, %arg1 : i32, i32, i32
  }
}

</mosaic_0001>

<llo_original>
// kernel: tpu_custom_call.1
$region0: #{tpu_custom_call.1}
  #allocation0 [shape = 'u32[]', space=smem, size = 0x4, offset = 0x4, fixed_abs, tag = 'smem constant byte address 0x4 - core index']
  #allocation1 [shape = 'u32[144,128]{1,0:T(1,128)}', space=vmem, size = 0x12000, scoped, tag = 'internal scratch']
  %s0 = inlined_call_operand.hbm [shape: f32[2,2,4,4], index: 0, kind: input, shape index: {}]
  %s1 = inlined_call_operand.hbm [shape: f32[2,4,256], index: 1, kind: input, shape index: {}]
  %s2 = inlined_call_operand.hbm [shape: f32[2,4,256], index: 2, kind: input, shape index: {}]
  %s3 = inlined_call_operand.hbm [shape: f32[2,4,256], index: 3, kind: output, shape index: {0}]
  %s4 = inlined_call_operand.hbm [shape: f32[2,4,256], index: 4, kind: output, shape index: {1}]
  %5 = xla_tuple %s3, %s4
  %s6 = sld [smem:[#allocation0]]
  $region65: #{tpu_custom_call.1} parent=0
    _
  %s8 = ssub.s32 1, %s6
  %s9 = scalar_select 0, %s8, %s6
  $region1: #{tpu_custom_call.1} parent=0
    #allocation2 [shape = 'u8[8192]{0}', space=vmem, size = 0x2000, scoped, tag = 'input window, operand 0, single buffered']
    #allocation3 [shape = 's32[2]{0}', space=sflag, size = 0x8, scoped, tag = 'scoped memory for tpu_custom_call.1']
    #allocation4 [shape = 's32[2]{0}', space=sflag, size = 0x8, scoped, tag = 'scoped memory for tpu_custom_call.1']
    #allocation5 [shape = 'u8[4096]{0}', space=vmem, size = 0x1000, scoped, tag = 'input window, operand 1']
    #allocation6 [shape = 's32[2]{0}', space=sflag, size = 0x8, scoped, tag = 'scoped memory for tpu_custom_call.1']
    #allocation7 [shape = 'u8[4096]{0}', space=vmem, size = 0x1000, scoped, tag = 'input window, operand 2']
    #allocation8 [shape = 'u8[4096]{0}', space=vmem, size = 0x1000, scoped, tag = 'output window, operand 0']
    #allocation9 [shape = 'u8[4096]{0}', space=vmem, size = 0x1000, scoped, tag = 'output window, operand 1']
    #allocation10 [shape = 's32[2]{0}', space=sflag, size = 0x8, scoped, tag = 'scoped memory for tpu_custom_call.1']
    %10 = vsyncpa [#allocation3], 0
    %11 = vsyncpa [#allocation6], 0
    %s12 = scalar_lea.sflag [#allocation6], 1
    %13 = vsyncpa %s12, 0
    %14 = vsyncpa [#allocation4], 0
    %s15 = scalar_lea.sflag [#allocation4], 1
    %16 = vsyncpa %s15, 0
    %17 = vsyncpa [#allocation10], 0
    %s18 = scalar_lea.sflag [#allocation10], 1
    %19 = vsyncpa %s18, 0
    loop: start=0, step=1, limit=6
    $region2: #{tpu_custom_call.1} parent=1 // loop_pre_header
      _
    $region3: #{tpu_custom_call.1} parent=1 // loop_header
      %s21 = sphi 0, %s25
      %p22 = scmp.ge.s32.totalorder %s21, 6
      %s28 = sphi 0, %s40
      %s29 = sphi 0, %s36
      %s30 = sphi 0, %s28
      %s31 = sphi 0, %s29
      %s32 = sphi 0, %s30
      %s33 = sphi 0, %s31
      %s41 = sphi 0, %s41
      %s43 = sphi 0, %s41
      %s44 = sphi 0, %s43
      %s58 = sphi 0, %s44
      %s66 = sphi 0, %s68
      %s69 = sphi 0, %s66
      %s70 = sphi 0, %s69
      %s86 = sphi 0, %s70
      %s94 = sphi 0, %s96
      %s97 = sphi 0, %s94
      %s98 = sphi 0, %s97
      %s114 = sphi 0, %s98
      %s122 = sphi 0, %s124
      %s125 = sphi 0, %s122
      %s126 = sphi 0, %s125
      %s142 = sphi 0, %s126
      %s150 = sphi 0, %s152
      %s153 = sphi 0, %s150
      %s154 = sphi 0, %s153
      %s170 = sphi 0, %s154
    $region4: #{tpu_custom_call.1} parent=1 // loop_header_branch
      %24 = sbr.rel (%p22) target = $region8
    $region5: #{tpu_custom_call.1} parent=1 // loop_body
      %s26 = ssub.s32 %s21, 1
      %s27 = ssub.s32 %s21, 2
      %s34 = sadd.s32 1, %s29
      %p35 = scmp.ge.s32.totalorder %s34, 2
      %s36 = scalar_select %p35, 0, %s34
      %s37 = sadd.s32 1, %s28
      %s38 = scalar_select %p35, %s37, %s28
      %p39 = scmp.ge.s32.totalorder %s38, 2
      %s40 = scalar_select %p39, 0, %s38
      %s42 = sadd.s32 %s41, 1
      %p45 = scmp.eq.s32.totalorder %s21, 3
      %p46 = scmp.ne.s32.totalorder %s41, %s43
      %p47 = scmp.eq.s32.totalorder %s21, 0
      %p48 = por %p46, %p47
      %p49 = scmp.ne.s32.totalorder %s41, %s43
      %p50 = scmp.eq.s32.totalorder %s26, 3
      %p51 = por %p49, %p50
      %p52 = scmp.ne.s32.totalorder %s43, %s44
      %p53 = scmp.eq.s32.totalorder %s26, 0
      %p54 = por %p52, %p53
      %p55 = scmp.ne.s32.totalorder %s43, %s44
      %p56 = scmp.eq.s32.totalorder %s27, 3
      %p57 = por %p55, %p56
      %p59 = scmp.ne.s32.totalorder %s44, %s58
      %p60 = scmp.eq.s32.totalorder %s27, 0
      %p61 = por %p59, %p60
      %s62 = ssub.s32 %s28, %s40
      %s63 = ssub.s32 %s29, %s36
      %s64 = sor.u32 %s62, %s63
      %p65 = scmp.eq.s32.totalorder %s64, 0
      %s67 = sadd.s32 %s66, 1
      %s68 = scalar_select %p65, %s66, %s67
      %p71 = pneg %p65
      %p72 = scmp.eq.s32.totalorder %s21, 3
      %p73 = por %p71, %p72
      %p74 = scmp.ne.s32.totalorder %s66, %s69
      %p75 = scmp.eq.s32.totalorder %s21, 0
      %p76 = por %p74, %p75
      %p77 = scmp.ne.s32.totalorder %s66, %s69
      %p78 = scmp.eq.s32.totalorder %s26, 3
      %p79 = por %p77, %p78
      %p80 = scmp.ne.s32.totalorder %s69, %s70
      %p81 = scmp.eq.s32.totalorder %s26, 0
      %p82 = por %p80, %p81
      %p83 = scmp.ne.s32.totalorder %s69, %s70
      %p84 = scmp.eq.s32.totalorder %s27, 3
      %p85 = por %p83, %p84
      %p87 = scmp.ne.s32.totalorder %s70, %s86
      %p88 = scmp.eq.s32.totalorder %s27, 0
      %p89 = por %p87, %p88
      %s90 = ssub.s32 %s28, %s40
      %s91 = ssub.s32 %s29, %s36
      %s92 = sor.u32 %s90, %s91
      %p93 = scmp.eq.s32.totalorder %s92, 0
      %s95 = sadd.s32 %s94, 1
      %s96 = scalar_select %p93, %s94, %s95
      %p99 = pneg %p93
      %p100 = scmp.eq.s32.totalorder %s21, 3
      %p101 = por %p99, %p100
      %p102 = scmp.ne.s32.totalorder %s94, %s97
      %p103 = scmp.eq.s32.totalorder %s21, 0
      %p104 = por %p102, %p103
      %p105 = scmp.ne.s32.totalorder %s94, %s97
      %p106 = scmp.eq.s32.totalorder %s26, 3
      %p107 = por %p105, %p106
      %p108 = scmp.ne.s32.totalorder %s97, %s98
      %p109 = scmp.eq.s32.totalorder %s26, 0
      %p110 = por %p108, %p109
      %p111 = scmp.ne.s32.totalorder %s97, %s98
      %p112 = scmp.eq.s32.totalorder %s27, 3
      %p113 = por %p111, %p112
      %p115 = scmp.ne.s32.totalorder %s98, %s114
      %p116 = scmp.eq.s32.totalorder %s27, 0
      %p117 = por %p115, %p116
      %s118 = ssub.s32 %s28, %s40
      %s119 = ssub.s32 %s29, %s36
      %s120 = sor.u32 %s118, %s119
      %p121 = scmp.eq.s32.totalorder %s120, 0
      %s123 = sadd.s32 %s122, 1
      %s124 = scalar_select %p121, %s122, %s123
      %p127 = pneg %p121
      %p128 = scmp.eq.s32.totalorder %s21, 3
      %p129 = por %p127, %p128
      %p130 = scmp.ne.s32.totalorder %s122, %s125
      %p131 = scmp.eq.s32.totalorder %s21, 0
      %p132 = por %p130, %p131
      %p133 = scmp.ne.s32.totalorder %s122, %s125
      %p134 = scmp.eq.s32.totalorder %s26, 3
      %p135 = por %p133, %p134
      %p136 = scmp.ne.s32.totalorder %s125, %s126
      %p137 = scmp.eq.s32.totalorder %s26, 0
      %p138 = por %p136, %p137
      %p139 = scmp.ne.s32.totalorder %s125, %s126
      %p140 = scmp.eq.s32.totalorder %s27, 3
      %p141 = por %p139, %p140
      %p143 = scmp.ne.s32.totalorder %s126, %s142
      %p144 = scmp.eq.s32.totalorder %s27, 0
      %p145 = por %p143, %p144
      %s146 = ssub.s32 %s28, %s40
      %s147 = ssub.s32 %s29, %s36
      %s148 = sor.u32 %s146, %s147
      %p149 = scmp.eq.s32.totalorder %s148, 0
      %s151 = sadd.s32 %s150, 1
      %s152 = scalar_select %p149, %s150, %s151
      %p155 = pneg %p149
      %p156 = scmp.eq.s32.totalorder %s21, 3
      %p157 = por %p155, %p156
      %p158 = scmp.ne.s32.totalorder %s150, %s153
      %p159 = scmp.eq.s32.totalorder %s21, 0
      %p160 = por %p158, %p159
      %p161 = scmp.ne.s32.totalorder %s150, %s153
      %p162 = scmp.eq.s32.totalorder %s26, 3
      %p163 = por %p161, %p162
      %p164 = scmp.ne.s32.totalorder %s153, %s154
      %p165 = scmp.eq.s32.totalorder %s26, 0
      %p166 = por %p164, %p165
      %p167 = scmp.ne.s32.totalorder %s153, %s154
      %p168 = scmp.eq.s32.totalorder %s27, 3
      %p169 = por %p167, %p168
      %p171 = scmp.ne.s32.totalorder %s154, %s170
      %p172 = scmp.eq.s32.totalorder %s27, 0
      %p173 = por %p171, %p172
      %p174 = scmp.le.s32.totalorder 1, %s21
      %p175 = scmp.lt.s32.totalorder %s21, 5
      %p176 = pnand %p174, %p175
      %p177 = pneg %p176
      // Predicated region
      $region9: #{tpu_custom_call.1} parent=5 // pred_check
        _
      $region10: #{tpu_custom_call.1} parent=5 // pred_check_branch
        %179 = sbr.rel (%p176) target = $region12
      $region11: #{tpu_custom_call.1} parent=5 // pred_region
        %s180 = ssub.s32 %s21, 1
        // Predicated region
        $region13: #{tpu_custom_call.1} parent=11 // pred_check
          %p181 = pneg %p54
        $region14: #{tpu_custom_call.1} parent=11 // pred_check_branch
          %183 = sbr.rel (%p181) target = $region16
        $region15: #{tpu_custom_call.1} parent=11 // pred_region
          %s185 = ssub.s32 256, 256
          %186 = vsyncadd [#allocation3], %s185
          %s187 = sshll.u32 [#allocation2], 4
          %s188 = int_to_ptr.vmem [resolvable:$true] %s187
          %193 = dma.hbm_to_vmem [thread:$0]  %s0, 256, %s188, [#allocation3], 64, 64, 4
        $region16: #{tpu_custom_call.1} parent=11 // pred_fallthru
          _
      $region12: #{tpu_custom_call.1} parent=5 // pred_fallthru
        _
      %p194 = scmp.lt.s32.totalorder %s21, 4
      // Predicated region
      $region17: #{tpu_custom_call.1} parent=5 // pred_check
        %p195 = pneg %p194
      $region18: #{tpu_custom_call.1} parent=5 // pred_check_branch
        %197 = sbr.rel (%p195) target = $region20
      $region19: #{tpu_custom_call.1} parent=5 // pred_region
        // Predicated region
        $region21: #{tpu_custom_call.1} parent=19 // pred_check
          %p198 = pneg %p76
        $region22: #{tpu_custom_call.1} parent=19 // pred_check_branch
          %200 = sbr.rel (%p198) target = $region24
        $region23: #{tpu_custom_call.1} parent=19 // pred_region
          %s201 = sand.u32 %s21, 1
          %s202 = scalar_lea.sflag [#allocation6], %s201
          %s203 = sand.u32 %s66, 1
          %s204 = smul.addr %s203, 4
          %s205 = scalar_lea.vmem [#allocation5], %s204
          %s207 = ssub.s32 64, 64
          %208 = vsyncadd %s202, %s207
          %s209 = smul.addr %s28, 2
          %s210 = sadd.s32 %s29, %s209
          %s211 = smul.addr %s210, 64
          %s212 = scalar_lea.hbm %s1, %s211
          %s214 = sshll.u32 %s205, 4
          %s215 = int_to_ptr.vmem [resolvable:$true] %s214
          %217 = dma.hbm_to_vmem [thread:$0]  %s212, 64, %s215, %s202
        $region24: #{tpu_custom_call.1} parent=19 // pred_fallthru
          _
        // Predicated region
        $region25: #{tpu_custom_call.1} parent=19 // pred_check
          %p218 = pneg %p104
        $region26: #{tpu_custom_call.1} parent=19 // pred_check_branch
          %220 = sbr.rel (%p218) target = $region28
        $region27: #{tpu_custom_call.1} parent=19 // pred_region
          %s221 = sand.u32 %s21, 1
          %s222 = scalar_lea.sflag [#allocation6], %s221
          %s223 = sand.u32 %s94, 1
          %s224 = smul.addr %s223, 4
          %s225 = scalar_lea.vmem [#allocation7], %s224
          %s227 = ssub.s32 64, 64
          %228 = vsyncadd %s222, %s227
          %s229 = smul.addr %s28, 2
          %s230 = sadd.s32 %s29, %s229
          %s231 = smul.addr %s230, 64
          %s232 = scalar_lea.hbm %s2, %s231
          %s234 = sshll.u32 %s225, 4
          %s235 = int_to_ptr.vmem [resolvable:$true] %s234
          %237 = dma.hbm_to_vmem [thread:$0]  %s232, 64, %s235, %s222
        $region28: #{tpu_custom_call.1} parent=19 // pred_fallthru
          _
      $region20: #{tpu_custom_call.1} parent=5 // pred_fallthru
        _
      %p238 = scmp.le.s32.totalorder 1, %s21
      %p239 = scmp.lt.s32.totalorder %s21, 5
      %p240 = pnand %p238, %p239
      %p241 = pneg %p240
      // Predicated region
      $region29: #{tpu_custom_call.1} parent=5 // pred_check
        _
      $region30: #{tpu_custom_call.1} parent=5 // pred_check_branch
        %243 = sbr.rel (%p240) target = $region32
      $region31: #{tpu_custom_call.1} parent=5 // pred_region
        %s244 = ssub.s32 %s21, 1
        // Predicated region
        $region33: #{tpu_custom_call.1} parent=31 // pred_check
          %p245 = pneg %p54
        $region34: #{tpu_custom_call.1} parent=31 // pred_check_branch
          %247 = sbr.rel (%p245) target = $region36
        $region35: #{tpu_custom_call.1} parent=31 // pred_region
          %248 = dma.done [#allocation3], 256
        $region36: #{tpu_custom_call.1} parent=31 // pred_fallthru
          _
        %s249 = sand.u32 %s26, 1
        %s250 = scalar_lea.sflag [#allocation6], %s249
        %s251 = sand.u32 %s69, 1
        %s252 = smul.addr %s251, 4
        %s253 = scalar_lea.vmem [#allocation5], %s252
        // Predicated region
        $region37: #{tpu_custom_call.1} parent=31 // pred_check
          %p254 = pneg %p82
        $region38: #{tpu_custom_call.1} parent=31 // pred_check_branch
          %256 = sbr.rel (%p254) target = $region40
        $region39: #{tpu_custom_call.1} parent=31 // pred_region
          %257 = dma.done %s250, 64
        $region40: #{tpu_custom_call.1} parent=31 // pred_fallthru
          _
        %s258 = sand.u32 %s26, 1
        %s259 = scalar_lea.sflag [#allocation6], %s258
        %s260 = sand.u32 %s97, 1
        %s261 = smul.addr %s260, 4
        %s262 = scalar_lea.vmem [#allocation7], %s261
        // Predicated region
        $region41: #{tpu_custom_call.1} parent=31 // pred_check
          %p263 = pneg %p110
        $region42: #{tpu_custom_call.1} parent=31 // pred_check_branch
          %265 = sbr.rel (%p263) target = $region44
        $region43: #{tpu_custom_call.1} parent=31 // pred_region
          %266 = dma.done %s259, 64
        $region44: #{tpu_custom_call.1} parent=31 // pred_fallthru
          _
        %p267 = pneg %p54
        %p268 = pneg %p51
        %s269 = sand.u32 %s26, 1
        %s270 = scalar_lea.sflag [#allocation6], %s269
        %s271 = sand.u32 %s69, 1
        %s272 = smul.addr %s271, 4
        %s273 = scalar_lea.vmem [#allocation5], %s272
        %p274 = pneg %p82
        %p275 = pneg %p79
        %s276 = sand.u32 %s26, 1
        %s277 = scalar_lea.sflag [#allocation6], %s276
        %s278 = sand.u32 %s97, 1
        %s279 = smul.addr %s278, 4
        %s280 = scalar_lea.vmem [#allocation7], %s279
        %p281 = pneg %p110
        %p282 = pneg %p107
        %p283 = pneg %p138
        %p284 = pneg %p135
        %s285 = sand.u32 %s125, 1
        %s286 = scalar_lea.sflag [#allocation4], %s285
        %s287 = sand.u32 %s125, 1
        %s288 = smul.addr %s287, 4
        %s289 = scalar_lea.vmem [#allocation8], %s288
        %p290 = pneg %p166
        %p291 = pneg %p163
        %s292 = sand.u32 %s153, 1
        %s293 = scalar_lea.sflag [#allocation10], %s292
        %s294 = sand.u32 %s153, 1
        %s295 = smul.addr %s294, 4
        %s296 = scalar_lea.vmem [#allocation9], %s295
        %v297 = vld [vmem:[%s253] sm:$0xf]
        %v298 = vld [vmem:[%s262] sm:$0xf]
        %v299 = vld [vmem:[#allocation2] sm:$0xf]
        %s300 = scalar_lea.vmem [#allocation2], 4
        %v301 = vld [vmem:[%s300] sm:$0xf]
        %vm302 = vcmask 31744
        %v304 = vsel %vm302, %v301, 0
        %vm306 = vcmask 1043456
        %v308 = vsel %vm306, %v298, 0
        %310 = vmatprep.subr.mxu0 0.0
        %311 = vmatpush1.msra.mxu0 %v308
        %312 = vmatprep.subr.mxu0 0.0
        %313 = vmatpush1.msra.mxu0 0.0
        %314 = vmatprep.subr.mxu0 0.0
        %315 = vmatpush1.msra.mxu0 0.0
        %316 = vmatprep.subr.mxu0 0.0
        %317 = vmatpush1.msra.mxu0 0.0
        %318 = vmatprep.subr.mxu0 0.0
        %319 = vmatpush1.msra.mxu0 0.0
        %320 = vmatprep.subr.mxu0 0.0
        %321 = vmatpush1.msra.mxu0 0.0
        %322 = vmatprep.subr.mxu0 0.0
        %323 = vmatpush1.msra.mxu0 0.0
        %324 = vmatprep.subr.mxu0 0.0
        %325 = vmatpush1.msra.mxu0 0.0
        %326 = vmatprep.subr.mxu0 0.0
        %327 = vmatpush1.msra.mxu0 0.0
        %328 = vmatprep.subr.mxu0 0.0
        %329 = vmatpush1.msra.mxu0 0.0
        %330 = vmatprep.subr.mxu0 0.0
        %331 = vmatpush1.msra.mxu0 0.0
        %332 = vmatprep.subr.mxu0 0.0
        %333 = vmatpush1.msra.mxu0 0.0
        %334 = vmatprep.subr.mxu0 0.0
        %335 = vmatpush1.msra.mxu0 0.0
        %336 = vmatprep.subr.mxu0 0.0
        %337 = vmatpush1.msra.mxu0 0.0
        %338 = vmatprep.subr.mxu0 0.0
        %339 = vmatpush1.msra.mxu0 0.0
        %340 = vmatprep.subr.mxu0 0.0
        %341 = vmatpush1.msra.mxu0 0.0
        %342 = vmatprep.subr.mxu0 0.0
        %343 = vmatpush1.msra.mxu0 0.0
        %344 = vmatprep.subr.mxu0 0.0
        %345 = vmatpush1.msra.mxu0 0.0
        %346 = vmatprep.subr.mxu0 0.0
        %347 = vmatpush1.msra.mxu0 0.0
        %348 = vmatprep.subr.mxu0 0.0
        %349 = vmatpush1.msra.mxu0 0.0
        %350 = vmatprep.subr.mxu0 0.0
        %351 = vmatpush1.msra.mxu0 0.0
        %352 = vmatprep.subr.mxu0 0.0
        %353 = vmatpush1.msra.mxu0 0.0
        %354 = vmatprep.subr.mxu0 0.0
        %355 = vmatpush1.msra.mxu0 0.0
        %356 = vmatprep.subr.mxu0 0.0
        %357 = vmatpush1.msra.mxu0 0.0
        %358 = vmatprep.subr.mxu0 0.0
        %359 = vmatpush1.msra.mxu0 0.0
        %360 = vmatprep.subr.mxu0 0.0
        %361 = vmatpush1.msra.mxu0 0.0
        %362 = vmatprep.subr.mxu0 0.0
        %363 = vmatpush1.msra.mxu0 0.0
        %364 = vmatprep.subr.mxu0 0.0
        %365 = vmatpush1.msra.mxu0 0.0
        %366 = vmatprep.subr.mxu0 0.0
        %367 = vmatpush1.msra.mxu0 0.0
        %368 = vmatprep.subr.mxu0 0.0
        %369 = vmatpush1.msra.mxu0 0.0
        %370 = vmatprep.subr.mxu0 0.0
        %371 = vmatpush1.msra.mxu0 0.0
        %372 = vmatprep.subr.mxu0 0.0
        %373 = vmatpush1.msra.mxu0 0.0
        %374 = vmatprep.mubr.f32.mxu0 0.0
        %375 = vmatmul.mubr.f32.gmra.mrb[0].mxu0 %v304
        %v376 = vpop.f32.mrb[0].mxu0
        %v377 = vadd.f32 0.0, %v376
        %v378 = vpop.f32.mrb[0].mxu0
        %379 = vdwg.mxu0
        %v381 = vsel %vm302, %v299, 0
        %v384 = vsel %vm306, %v297, 0
        %386 = vmatprep.subr.mxu0 0.0
        %387 = vmatpush1.msra.mxu0 %v384
        %388 = vmatprep.subr.mxu0 0.0
        %389 = vmatpush1.msra.mxu0 0.0
        %390 = vmatprep.subr.mxu0 0.0
        %391 = vmatpush1.msra.mxu0 0.0
        %392 = vmatprep.subr.mxu0 0.0
        %393 = vmatpush1.msra.mxu0 0.0
        %394 = vmatprep.subr.mxu0 0.0
        %395 = vmatpush1.msra.mxu0 0.0
        %396 = vmatprep.subr.mxu0 0.0
        %397 = vmatpush1.msra.mxu0 0.0
        %398 = vmatprep.subr.mxu0 0.0
        %399 = vmatpush1.msra.mxu0 0.0
        %400 = vmatprep.subr.mxu0 0.0
        %401 = vmatpush1.msra.mxu0 0.0
        %402 = vmatprep.subr.mxu0 0.0
        %403 = vmatpush1.msra.mxu0 0.0
        %404 = vmatprep.subr.mxu0 0.0
        %405 = vmatpush1.msra.mxu0 0.0
        %406 = vmatprep.subr.mxu0 0.0
        %407 = vmatpush1.msra.mxu0 0.0
        %408 = vmatprep.subr.mxu0 0.0
        %409 = vmatpush1.msra.mxu0 0.0
        %410 = vmatprep.subr.mxu0 0.0
        %411 = vmatpush1.msra.mxu0 0.0
        %412 = vmatprep.subr.mxu0 0.0
        %413 = vmatpush1.msra.mxu0 0.0
        %414 = vmatprep.subr.mxu0 0.0
        %415 = vmatpush1.msra.mxu0 0.0
        %416 = vmatprep.subr.mxu0 0.0
        %417 = vmatpush1.msra.mxu0 0.0
        %418 = vmatprep.subr.mxu0 0.0
        %419 = vmatpush1.msra.mxu0 0.0
        %420 = vmatprep.subr.mxu0 0.0
        %421 = vmatpush1.msra.mxu0 0.0
        %422 = vmatprep.subr.mxu0 0.0
        %423 = vmatpush1.msra.mxu0 0.0
        %424 = vmatprep.subr.mxu0 0.0
        %425 = vmatpush1.msra.mxu0 0.0
        %426 = vmatprep.subr.mxu0 0.0
        %427 = vmatpush1.msra.mxu0 0.0
        %428 = vmatprep.subr.mxu0 0.0
        %429 = vmatpush1.msra.mxu0 0.0
        %430 = vmatprep.subr.mxu0 0.0
        %431 = vmatpush1.msra.mxu0 0.0
        %432 = vmatprep.subr.mxu0 0.0
        %433 = vmatpush1.msra.mxu0 0.0
        %434 = vmatprep.subr.mxu0 0.0
        %435 = vmatpush1.msra.mxu0 0.0
        %436 = vmatprep.subr.mxu0 0.0
        %437 = vmatpush1.msra.mxu0 0.0
        %438 = vmatprep.subr.mxu0 0.0
        %439 = vmatpush1.msra.mxu0 0.0
        %440 = vmatprep.subr.mxu0 0.0
        %441 = vmatpush1.msra.mxu0 0.0
        %442 = vmatprep.subr.mxu0 0.0
        %443 = vmatpush1.msra.mxu0 0.0
        %444 = vmatprep.subr.mxu0 0.0
        %445 = vmatpush1.msra.mxu0 0.0
        %446 = vmatprep.subr.mxu0 0.0
        %447 = vmatpush1.msra.mxu0 0.0
        %448 = vmatprep.subr.mxu0 0.0
        %449 = vmatpush1.msra.mxu0 0.0
        %450 = vmatprep.mubr.f32.mxu0 0.0
        %451 = vmatmul.mubr.f32.gmra.mrb[0].mxu0 %v381
        %v452 = vpop.f32.mrb[0].mxu0
        %v453 = vadd.f32 %v377, %v452
        %v454 = vpop.f32.mrb[0].mxu0
        %455 = vdwg.mxu0
        %456 = vst [vmem:[%s289] sm:$0xf] %v453
        %s457 = scalar_lea.vmem [#allocation2], 8
        %v458 = vld [vmem:[%s457] sm:$0xf]
        %s459 = scalar_lea.vmem [#allocation2], 12
        %v460 = vld [vmem:[%s459] sm:$0xf]
        %v462 = vsel %vm302, %v460, 0
        %464 = vmatprep.subr.mxu0 0.0
        %465 = vmatpush1.msra.mxu0 %v308
        %466 = vmatprep.subr.mxu0 0.0
        %467 = vmatpush1.msra.mxu0 0.0
        %468 = vmatprep.subr.mxu0 0.0
        %469 = vmatpush1.msra.mxu0 0.0
        %470 = vmatprep.subr.mxu0 0.0
        %471 = vmatpush1.msra.mxu0 0.0
        %472 = vmatprep.subr.mxu0 0.0
        %473 = vmatpush1.msra.mxu0 0.0
        %474 = vmatprep.subr.mxu0 0.0
        %475 = vmatpush1.msra.mxu0 0.0
        %476 = vmatprep.subr.mxu0 0.0
        %477 = vmatpush1.msra.mxu0 0.0
        %478 = vmatprep.subr.mxu0 0.0
        %479 = vmatpush1.msra.mxu0 0.0
        %480 = vmatprep.subr.mxu0 0.0
        %481 = vmatpush1.msra.mxu0 0.0
        %482 = vmatprep.subr.mxu0 0.0
        %483 = vmatpush1.msra.mxu0 0.0
        %484 = vmatprep.subr.mxu0 0.0
        %485 = vmatpush1.msra.mxu0 0.0
        %486 = vmatprep.subr.mxu0 0.0
        %487 = vmatpush1.msra.mxu0 0.0
        %488 = vmatprep.subr.mxu0 0.0
        %489 = vmatpush1.msra.mxu0 0.0
        %490 = vmatprep.subr.mxu0 0.0
        %491 = vmatpush1.msra.mxu0 0.0
        %492 = vmatprep.subr.mxu0 0.0
        %493 = vmatpush1.msra.mxu0 0.0
        %494 = vmatprep.subr.mxu0 0.0
        %495 = vmatpush1.msra.mxu0 0.0
        %496 = vmatprep.subr.mxu0 0.0
        %497 = vmatpush1.msra.mxu0 0.0
        %498 = vmatprep.subr.mxu0 0.0
        %499 = vmatpush1.msra.mxu0 0.0
        %500 = vmatprep.subr.mxu0 0.0
        %501 = vmatpush1.msra.mxu0 0.0
        %502 = vmatprep.subr.mxu0 0.0
        %503 = vmatpush1.msra.mxu0 0.0
        %504 = vmatprep.subr.mxu0 0.0
        %505 = vmatpush1.msra.mxu0 0.0
        %506 = vmatprep.subr.mxu0 0.0
        %507 = vmatpush1.msra.mxu0 0.0
        %508 = vmatprep.subr.mxu0 0.0
        %509 = vmatpush1.msra.mxu0 0.0
        %510 = vmatprep.subr.mxu0 0.0
        %511 = vmatpush1.msra.mxu0 0.0
        %512 = vmatprep.subr.mxu0 0.0
        %513 = vmatpush1.msra.mxu0 0.0
        %514 = vmatprep.subr.mxu0 0.0
        %515 = vmatpush1.msra.mxu0 0.0
        %516 = vmatprep.subr.mxu0 0.0
        %517 = vmatpush1.msra.mxu0 0.0
        %518 = vmatprep.subr.mxu0 0.0
        %519 = vmatpush1.msra.mxu0 0.0
        %520 = vmatprep.subr.mxu0 0.0
        %521 = vmatpush1.msra.mxu0 0.0
        %522 = vmatprep.subr.mxu0 0.0
        %523 = vmatpush1.msra.mxu0 0.0
        %524 = vmatprep.subr.mxu0 0.0
        %525 = vmatpush1.msra.mxu0 0.0
        %526 = vmatprep.subr.mxu0 0.0
        %527 = vmatpush1.msra.mxu0 0.0
        %528 = vmatprep.mubr.f32.mxu0 0.0
        %529 = vmatmul.mubr.f32.gmra.mrb[0].mxu0 %v462
        %v530 = vpop.f32.mrb[0].mxu0
        %v531 = vadd.f32 0.0, %v530
        %v532 = vpop.f32.mrb[0].mxu0
        %533 = vdwg.mxu0
        %v535 = vsel %vm302, %v458, 0
        %537 = vmatprep.subr.mxu0 0.0
        %538 = vmatpush1.msra.mxu0 %v384
        %539 = vmatprep.subr.mxu0 0.0
        %540 = vmatpush1.msra.mxu0 0.0
        %541 = vmatprep.subr.mxu0 0.0
        %542 = vmatpush1.msra.mxu0 0.0
        %543 = vmatprep.subr.mxu0 0.0
        %544 = vmatpush1.msra.mxu0 0.0
        %545 = vmatprep.subr.mxu0 0.0
        %546 = vmatpush1.msra.mxu0 0.0
        %547 = vmatprep.subr.mxu0 0.0
        %548 = vmatpush1.msra.mxu0 0.0
        %549 = vmatprep.subr.mxu0 0.0
        %550 = vmatpush1.msra.mxu0 0.0
        %551 = vmatprep.subr.mxu0 0.0
        %552 = vmatpush1.msra.mxu0 0.0
        %553 = vmatprep.subr.mxu0 0.0
        %554 = vmatpush1.msra.mxu0 0.0
        %555 = vmatprep.subr.mxu0 0.0
        %556 = vmatpush1.msra.mxu0 0.0
        %557 = vmatprep.subr.mxu0 0.0
        %558 = vmatpush1.msra.mxu0 0.0
        %559 = vmatprep.subr.mxu0 0.0
        %560 = vmatpush1.msra.mxu0 0.0
        %561 = vmatprep.subr.mxu0 0.0
        %562 = vmatpush1.msra.mxu0 0.0
        %563 = vmatprep.subr.mxu0 0.0
        %564 = vmatpush1.msra.mxu0 0.0
        %565 = vmatprep.subr.mxu0 0.0
        %566 = vmatpush1.msra.mxu0 0.0
        %567 = vmatprep.subr.mxu0 0.0
        %568 = vmatpush1.msra.mxu0 0.0
        %569 = vmatprep.subr.mxu0 0.0
        %570 = vmatpush1.msra.mxu0 0.0
        %571 = vmatprep.subr.mxu0 0.0
        %572 = vmatpush1.msra.mxu0 0.0
        %573 = vmatprep.subr.mxu0 0.0
        %574 = vmatpush1.msra.mxu0 0.0
        %575 = vmatprep.subr.mxu0 0.0
        %576 = vmatpush1.msra.mxu0 0.0
        %577 = vmatprep.subr.mxu0 0.0
        %578 = vmatpush1.msra.mxu0 0.0
        %579 = vmatprep.subr.mxu0 0.0
        %580 = vmatpush1.msra.mxu0 0.0
        %581 = vmatprep.subr.mxu0 0.0
        %582 = vmatpush1.msra.mxu0 0.0
        %583 = vmatprep.subr.mxu0 0.0
        %584 = vmatpush1.msra.mxu0 0.0
        %585 = vmatprep.subr.mxu0 0.0
        %586 = vmatpush1.msra.mxu0 0.0
        %587 = vmatprep.subr.mxu0 0.0
        %588 = vmatpush1.msra.mxu0 0.0
        %589 = vmatprep.subr.mxu0 0.0
        %590 = vmatpush1.msra.mxu0 0.0
        %591 = vmatprep.subr.mxu0 0.0
        %592 = vmatpush1.msra.mxu0 0.0
        %593 = vmatprep.subr.mxu0 0.0
        %594 = vmatpush1.msra.mxu0 0.0
        %595 = vmatprep.subr.mxu0 0.0
        %596 = vmatpush1.msra.mxu0 0.0
        %597 = vmatprep.subr.mxu0 0.0
        %598 = vmatpush1.msra.mxu0 0.0
        %599 = vmatprep.subr.mxu0 0.0
        %600 = vmatpush1.msra.mxu0 0.0
        %601 = vmatprep.mubr.f32.mxu0 0.0
        %602 = vmatmul.mubr.f32.gmra.mrb[0].mxu0 %v535
        %v603 = vpop.f32.mrb[0].mxu0
        %v604 = vadd.f32 %v531, %v603
        %v605 = vpop.f32.mrb[0].mxu0
        %606 = vdwg.mxu0
        %607 = vst [vmem:[%s296] sm:$0xf] %v604
        %s608 = sand.u32 %s125, 1
        %s609 = scalar_lea.sflag [#allocation4], %s608
        %s610 = sand.u32 %s125, 1
        %s611 = smul.addr %s610, 4
        %s612 = scalar_lea.vmem [#allocation8], %s611
        %s613 = sand.u32 %s153, 1
        %s614 = scalar_lea.sflag [#allocation10], %s613
        %s615 = sand.u32 %s153, 1
        %s616 = smul.addr %s615, 4
        %s617 = scalar_lea.vmem [#allocation9], %s616
        // Predicated region
        $region45: #{tpu_custom_call.1} parent=31 // pred_check
          %p618 = pneg %p135
        $region46: #{tpu_custom_call.1} parent=31 // pred_check_branch
          %620 = sbr.rel (%p618) target = $region48
        $region47: #{tpu_custom_call.1} parent=31 // pred_region
          %s622 = ssub.s32 64, 64
          %623 = vsyncadd %s609, %s622
          %s624 = smul.addr %s30, 2
          %s625 = sadd.s32 %s31, %s624
          %s626 = smul.addr %s625, 64
          %s627 = scalar_lea.hbm %s3, %s626
          %s629 = sshll.u32 %s612, 4
          %s630 = int_to_ptr.vmem [resolvable:$true] %s629
          %632 = dma.vmem_to_hbm [thread:$0]  %s630, 64, %s627, %s609
        $region48: #{tpu_custom_call.1} parent=31 // pred_fallthru
          _
        // Predicated region
        $region49: #{tpu_custom_call.1} parent=31 // pred_check
          %p633 = pneg %p163
        $region50: #{tpu_custom_call.1} parent=31 // pred_check_branch
          %635 = sbr.rel (%p633) target = $region52
        $region51: #{tpu_custom_call.1} parent=31 // pred_region
          %s637 = ssub.s32 64, 64
          %638 = vsyncadd %s614, %s637
          %s639 = smul.addr %s30, 2
          %s640 = sadd.s32 %s31, %s639
          %s641 = smul.addr %s640, 64
          %s642 = scalar_lea.hbm %s4, %s641
          %s644 = sshll.u32 %s617, 4
          %s645 = int_to_ptr.vmem [resolvable:$true] %s644
          %647 = dma.vmem_to_hbm [thread:$0]  %s645, 64, %s642, %s614
        $region52: #{tpu_custom_call.1} parent=31 // pred_fallthru
          _
      $region32: #{tpu_custom_call.1} parent=5 // pred_fallthru
        _
      %p648 = scmp.le.s32.totalorder 2, %s21
      // Predicated region
      $region53: #{tpu_custom_call.1} parent=5 // pred_check
        %p649 = pneg %p648
      $region54: #{tpu_custom_call.1} parent=5 // pred_check_branch
        %651 = sbr.rel (%p649) target = $region56
      $region55: #{tpu_custom_call.1} parent=5 // pred_region
        %s652 = ssub.s32 %s21, 2
        // Predicated region
        $region57: #{tpu_custom_call.1} parent=55 // pred_check
          %p653 = pneg %p141
        $region58: #{tpu_custom_call.1} parent=55 // pred_check_branch
          %655 = sbr.rel (%p653) target = $region60
        $region59: #{tpu_custom_call.1} parent=55 // pred_region
          %s656 = sand.u32 %s126, 1
          %s657 = scalar_lea.sflag [#allocation4], %s656
          %s658 = sand.u32 %s126, 1
          %s659 = smul.addr %s658, 4
          %s660 = scalar_lea.vmem [#allocation8], %s659
          %661 = dma.done %s657, 64
        $region60: #{tpu_custom_call.1} parent=55 // pred_fallthru
          _
        // Predicated region
        $region61: #{tpu_custom_call.1} parent=55 // pred_check
          %p662 = pneg %p169
        $region62: #{tpu_custom_call.1} parent=55 // pred_check_branch
          %664 = sbr.rel (%p662) target = $region64
        $region63: #{tpu_custom_call.1} parent=55 // pred_region
          %s665 = sand.u32 %s154, 1
          %s666 = scalar_lea.sflag [#allocation10], %s665
          %s667 = sand.u32 %s154, 1
          %s668 = smul.addr %s667, 4
          %s669 = scalar_lea.vmem [#allocation9], %s668
          %670 = dma.done %s666, 64
        $region64: #{tpu_custom_call.1} parent=55 // pred_fallthru
          _
      $region56: #{tpu_custom_call.1} parent=5 // pred_fallthru
        _
    $region6: #{tpu_custom_call.1} parent=1 // loop_footer
      %s25 = sadd.s32 1, %s21
    $region7: #{tpu_custom_call.1} parent=1 // loop_footer_branch
      %20 = sbr.rel target = $region3
    $region8: #{tpu_custom_call.1} parent=1 // loop_exit
      _
    %671 = vsyncpa [#allocation3], 1
    %s672 = scalar_lea.sflag [#allocation3], 1
    %673 = vsyncpa %s672, 1
    %674 = vsyncpa [#allocation6], 1
    %s675 = scalar_lea.sflag [#allocation6], 1
    %676 = vsyncpa %s675, 1
    %677 = vsyncpa [#allocation4], 1
    %s678 = scalar_lea.sflag [#allocation4], 1
    %679 = vsyncpa %s678, 1
    %680 = vsyncpa [#allocation10], 1
    %s681 = scalar_lea.sflag [#allocation10], 1
    %682 = vsyncpa %s681, 1

</llo_original>
